<compile_context>
chip_gen: v7x
topology: tpu7x:2x2x1
jax: 0.10.0
libtpu: 0.0.40
codegen_flags: <defaults>
</compile_context>

<pallas_src>
import math
from functools import partial

import jax
import jax.numpy as jnp
from jax import lax
from jax.experimental import pallas as pl
from jax.experimental.pallas import tpu as pltpu


def _round_up(n, m):
    return int(pl.cdiv(n, m)) * m


def _pick_tk(d, max_tk=512):
    """Largest K-tile <= max_tk that divides d and is a multiple of 128, else whole d."""
    tk = math.gcd(d, max_tk)
    if tk < 128:
        return d
    return tk


def _pick_tm(m8, tm_max):
    """Row tile (multiple of 8, <= tm_max).

    Prefers a divisor of m8 (no padded tail) and splits medium inputs into at
    least two row tiles so the 'parallel' axis can be sharded across two
    TensorCores (v7x megacore)."""
    tm_max = max(8, (tm_max // 8) * 8)
    if m8 <= tm_max:
        if m8 >= 512 and m8 % 16 == 0:
            return m8 // 2          # >=2 row tiles for megacore when work is plentiful
        return m8
    t = tm_max
    while t >= max(128, tm_max // 2):
        if m8 % t == 0:             # divisor -> no padded tail
            return t
        t -= 8
    return tm_max                   # no good divisor: small padded tail


def _resonance_kernel(x_ref, w_ref, p_ref, o_ref, *acc_scratch, approx_gelu):
    # grid = (row_tiles, n_tiles, k_tiles); N and K are reduction/"arbitrary" axes.
    # With an f32 output there is no scratch: the resident output block is the
    # accumulator. With a narrower output dtype, acc_scratch[0] holds the f32 accum.
    acc_ref = acc_scratch[0] if acc_scratch else o_ref

    n = pl.program_id(1)
    k = pl.program_id(2)
    nn = pl.num_programs(1)
    nk = pl.num_programs(2)
    tn = w_ref.shape[1]
    col = pl.ds(pl.multiple_of(n * tn, tn), tn)

    @pl.when(k == 0)
    def _():
        acc_ref[:, col] = jnp.zeros((acc_ref.shape[0], tn), acc_ref.dtype)

    # Canonical (tm,tk)@(tk,tn) matmul: W already transposed & resonance-scaled
    # in the wrapper, bf16 operands with f32 accumulation on the MXU.
    acc_ref[:, col] += jnp.dot(x_ref[...], w_ref[...],
                               preferred_element_type=jnp.float32)

    @pl.when((n == nn - 1) & (k == nk - 1))
    def _():
        b = p_ref[0:1, :]       # scaled bias       (1, d) f32
        gamma = p_ref[1:2, :]   # LayerNorm weight  (1, d) f32
        beta = p_ref[2:3, :]    # LayerNorm bias    (1, d) f32

        y = acc_ref[...] + b

        if approx_gelu:
            # tanh-approximate GELU: runs on the EUP slot (useful on v5e).
            c = math.sqrt(2.0 / math.pi)
            y = 0.5 * y * (1.0 + jnp.tanh(c * (y + 0.044715 * y * y * y)))
        else:
            # Exact GELU (PyTorch nn.GELU default uses erf).
            y = 0.5 * y * (1.0 + lax.erf(y * (1.0 / math.sqrt(2.0))))

        # Dropout(p=0.05) in eval mode -> identity.
        # TODO(synk): training-mode dropout (stateful PRNG mask) not implemented.

        # LayerNorm over last dim, eps=1e-5, all in f32.
        mean = jnp.mean(y, axis=-1, keepdims=True)
        cen = y - mean
        var = jnp.mean(cen * cen, axis=-1, keepdims=True)
        out = cen * lax.rsqrt(var + 1e-5) * gamma + beta

        o_ref[...] = out.astype(o_ref.dtype)


def political_resonance_forward(x, w, b, phase_shift, gamma, beta, *,
                                tm=512, tn=None, tk=None,
                                compute_dtype=jnp.bfloat16,
                                out_dtype=jnp.float32,
                                approx_gelu=False):
    """x: (..., d_model); w: (d_model, d_model) in nn.Linear (out, in) layout."""
    d = x.shape[-1]
    lead = x.shape[:-1]
    x2 = x.reshape(-1, d)
    M = x2.shape[0]

    # Fold the resonance scale into the linear layer (exact algebraic rewrite):
    #   (x @ W.T + b) * s == x @ ((s[:, None] * W).T) + s * b,  s = 1 + 0.5*cos(phase)
    # The transpose happens once in HBM (fuses with the scale multiply under jit) so
    # the kernel RHS arrives with d_out on lanes -- the natural MXU layout.
    scale = 1.0 + 0.5 * jnp.cos(phase_shift.astype(jnp.float32))
    w_t = (w.astype(jnp.float32) * scale[:, None]).T.astype(compute_dtype)  # (d_in, d_out)
    b_scaled = b.astype(jnp.float32) * scale

    # Pack per-feature vectors into one (8, d) slab -> single parameter stream.
    params = jnp.zeros((8, d), jnp.float32)
    params = params.at[0].set(b_scaled)
    params = params.at[1].set(gamma.astype(jnp.float32))
    params = params.at[2].set(beta.astype(jnp.float32))

    # Tile selection.
    if tk is None:
        tk = _pick_tk(d)
    if tn is None:
        tn = 2048 if (d >= 4096 and d % 2048 == 0) else d   # N-tile W only for large d
    nk = d // tk
    nn = d // tn

    m8 = _round_up(M, 8)
    tm_eff = _pick_tm(m8, tm)
    M_pad = _round_up(M, tm_eff)

    x2 = x2.astype(compute_dtype)
    if M_pad != M:
        x2 = jnp.pad(x2, ((0, M_pad - M), (0, 0)))

    grid = (M_pad // tm_eff, nn, nk)
    needs_scratch = jnp.dtype(out_dtype) != jnp.dtype(jnp.float32)

    # VMEM budget: x, W, params, out all double-buffered + optional f32 accumulator.
    cdt = jnp.dtype(compute_dtype).itemsize
    odt = jnp.dtype(out_dtype).itemsize
    vmem_bytes = (
        2 * tm_eff * tk * cdt            # x blocks
        + 2 * tk * tn * cdt              # W blocks
        + 2 * 8 * d * 4                  # packed params
        + 2 * tm_eff * d * odt           # output blocks (accumulator when f32)
        + (tm_eff * d * 4 if needs_scratch else 0))
    vmem_limit = int(min(max(vmem_bytes * 1.2, 32 * 2**20) + (2 << 20), 100 * 2**20))

    cost = pl.CostEstimate(
        flops=2 * M_pad * d * d,
        transcendentals=M_pad * d,
        bytes_accessed=int(M_pad * d * cdt           # x in
                           + grid[0] * d * d * cdt   # W re-streamed per row tile
                           + 8 * d * 4               # params
                           + M_pad * d * odt),       # out
    )

    out = pl.pallas_call(
        partial(_resonance_kernel, approx_gelu=approx_gelu),
        out_shape=jax.ShapeDtypeStruct((M_pad, d), out_dtype),
        grid_spec=pltpu.PrefetchScalarGridSpec(
            num_scalar_prefetch=0,
            grid=grid,
            in_specs=[
                pl.BlockSpec((tm_eff, tk), lambda i, n, k: (i, k)),  # x rows / K slice
                pl.BlockSpec((tk, tn), lambda i, n, k: (k, n)),      # W.T (in, out) tile
                pl.BlockSpec((8, d), lambda i, n, k: (0, 0)),        # bias/gamma/beta slab
            ],
            out_specs=pl.BlockSpec((tm_eff, d), lambda i, n, k: (i, 0)),
            scratch_shapes=([pltpu.VMEM((tm_eff, d), jnp.float32)]
                            if needs_scratch else []),
        ),
        compiler_params=pltpu.CompilerParams(
            dimension_semantics=("parallel", "arbitrary", "arbitrary"),
            vmem_limit_bytes=vmem_limit),
        cost_estimate=cost,
    )(x2, w_t, params)

    if M_pad != M:
        out = out[:M]
    return out.reshape(*lead, d)


if __name__ == "__main__":
    # Small shapes consistent with the module: (batch, seq, d_model)
    batch, seq, d_model = 2, 8, 256

    key = jax.random.PRNGKey(0)
    kx, kw, kb, kp = jax.random.split(key, 4)

    x = jax.random.normal(kx, (batch, seq, d_model), dtype=jnp.float32)

    # Deterministic parameter init mirroring nn.Linear / LayerNorm / phase_shift.
    bound = 1.0 / math.sqrt(d_model)
    w = jax.random.uniform(kw, (d_model, d_model), jnp.float32, -bound, bound)
    b = jax.random.uniform(kb, (d_model,), jnp.float32, -bound, bound)
    phase_shift = jax.random.normal(kp, (d_model,), jnp.float32) * 0.1
    gamma = jnp.ones((d_model,), jnp.float32)
    beta = jnp.zeros((d_model,), jnp.float32)

    fwd = jax.jit(political_resonance_forward)
    out = fwd(x, w, b, phase_shift, gamma, beta)
    jax.block_until_ready(out)

    # Pure-JAX reference (same scale folding and bf16 matmul path as the kernel).
    scale = 1.0 + 0.5 * jnp.cos(phase_shift)
    wt16 = (w * scale[:, None]).T.astype(jnp.bfloat16)
    xb16 = x.reshape(-1, d_model).astype(jnp.bfloat16)
    y_ref = jnp.dot(xb16, wt16, preferred_element_type=jnp.float32) + b * scale
    y_ref = 0.5 * y_ref * (1.0 + lax.erf(y_ref / math.sqrt(2.0)))
    mu = jnp.mean(y_ref, axis=-1, keepdims=True)
    var = jnp.mean((y_ref - mu) ** 2, axis=-1, keepdims=True)
    y_ref = (y_ref - mu) * lax.rsqrt(var + 1e-5) * gamma + beta
    y_ref = y_ref.reshape(batch, seq, d_model)

    assert jnp.allclose(out, y_ref, atol=2e-3, rtol=2e-3), "mismatch vs reference"
    print("KERNEL_OK")
</pallas_src>

<mosaic_0001>
module attributes {stable_mosaic.version = 11 : i64} {
  func.func @_resonance_kernel(%arg0: i32, %arg1: i32, %arg2: i32, %arg3: memref<16x256xbf16, #tpu.memory_space<vmem>>, %arg4: memref<256x256xbf16, #tpu.memory_space<vmem>>, %arg5: memref<8x256xf32, #tpu.memory_space<vmem>>, %arg6: memref<16x256xf32, #tpu.memory_space<vmem>>) attributes {dimension_semantics = [#tpu.dimension_semantics<parallel>, #tpu.dimension_semantics<arbitrary>, #tpu.dimension_semantics<arbitrary>], iteration_bounds = array<i64: 1, 1, 1>, scalar_prefetch = 0 : i64, scratch_operands = 0 : i64, tpu.core_type = #tpu.core_type<tc>, window_params = [{transform_indices = @transform_0, window_bounds = array<i64: 16, 256>}, {transform_indices = @transform_1, window_bounds = array<i64: 256, 256>}, {pipeline_mode = #tpu.pipeline_mode<synchronous>, transform_indices = @transform_2, window_bounds = array<i64: 8, 256>}, {transform_indices = @transform_3, window_bounds = array<i64: 16, 256>}]} {
    %c256_i32 = arith.constant 256 : i32
    %0 = arith.muli %arg1, %c256_i32 : i32
    %1 = tpu.assume_multiple %0, 256 : i32
    %c0_i32 = arith.constant 0 : i32
    %2 = arith.cmpi eq, %arg2, %c0_i32 : i32
    %3 = arith.extui %2 : i1 to i32
    %c0_i32_0 = arith.constant 0 : i32
    %4 = arith.cmpi ne, %3, %c0_i32_0 : i32
    scf.if %4 {
      %cst_9 = arith.constant 0.000000e+00 : f32
      %18 = vector.broadcast %cst_9 : f32 to vector<16x256xf32>
      %c0_10 = arith.constant 0 : index
      %19 = arith.index_cast %1 : i32 to index
      %20 = vector.load %arg6[%c0_10, %19] : memref<16x256xf32, #tpu.memory_space<vmem>>, vector<16x256xf32>
      tpu.vector_store %arg6[%c0_10, %19], %18 {strides = array<i32>} : memref<16x256xf32, #tpu.memory_space<vmem>>, vector<16x256xf32>,
    } else {
    }
    %c0 = arith.constant 0 : index
    %5 = arith.index_cast %1 : i32 to index
    %6 = vector.load %arg6[%c0, %5] : memref<16x256xf32, #tpu.memory_space<vmem>>, vector<16x256xf32>
    %c0_1 = arith.constant 0 : index
    %c0_2 = arith.constant 0 : index
    %7 = vector.load %arg3[%c0_1, %c0_2] : memref<16x256xbf16, #tpu.memory_space<vmem>>, vector<16x256xbf16>
    %c0_3 = arith.constant 0 : index
    %c0_4 = arith.constant 0 : index
    %8 = vector.load %arg4[%c0_3, %c0_4] : memref<256x256xbf16, #tpu.memory_space<vmem>>, vector<256x256xbf16>
    %cst = arith.constant dense<0.000000e+00> : vector<16x256xf32>
    %9 = tpu.matmul %7, %8, %cst {dimension_numbers = #tpu.dot_dimension_numbers<[1], [0], [0], [1], [0, 0, 1, 1], [], []>} : vector<16x256xbf16>, vector<256x256xbf16>, vector<16x256xf32> -> vector<16x256xf32>
    %10 = arith.addf %6, %9 : vector<16x256xf32>
    %c0_5 = arith.constant 0 : index
    %11 = arith.index_cast %1 : i32 to index
    %12 = vector.load %arg6[%c0_5, %11] : memref<16x256xf32, #tpu.memory_space<vmem>>, vector<16x256xf32>
    tpu.vector_store %arg6[%c0_5, %11], %10 {strides = array<i32>} : memref<16x256xf32, #tpu.memory_space<vmem>>, vector<16x256xf32>,
    %c0_i32_6 = arith.constant 0 : i32
    %13 = arith.cmpi eq, %arg1, %c0_i32_6 : i32
    %c0_i32_7 = arith.constant 0 : i32
    %14 = arith.cmpi eq, %arg2, %c0_i32_7 : i32
    %15 = arith.andi %13, %14 : i1
    %16 = arith.extui %15 : i1 to i32
    %c0_i32_8 = arith.constant 0 : i32
    %17 = arith.cmpi ne, %16, %c0_i32_8 : i32
    scf.if %17 {
      %c0_9 = arith.constant 0 : index
      %c0_10 = arith.constant 0 : index
      %18 = vector.load %arg5[%c0_9, %c0_10] : memref<8x256xf32, #tpu.memory_space<vmem>>, vector<1x256xf32>
      %c1 = arith.constant 1 : index
      %c0_11 = arith.constant 0 : index
      %19 = vector.load %arg5[%c1, %c0_11] : memref<8x256xf32, #tpu.memory_space<vmem>>, vector<1x256xf32>
      %c2 = arith.constant 2 : index
      %c0_12 = arith.constant 0 : index
      %20 = vector.load %arg5[%c2, %c0_12] : memref<8x256xf32, #tpu.memory_space<vmem>>, vector<1x256xf32>
      %c0_13 = arith.constant 0 : index
      %c0_14 = arith.constant 0 : index
      %21 = vector.load %arg6[%c0_13, %c0_14] : memref<16x256xf32, #tpu.memory_space<vmem>>, vector<16x256xf32>
      %22 = vector.broadcast %18 : vector<1x256xf32> to vector<16x256xf32>
      %23 = arith.addf %21, %22 : vector<16x256xf32>
      %cst_15 = arith.constant 5.000000e-01 : f32
      %24 = vector.broadcast %cst_15 : f32 to vector<16x256xf32>
      %25 = arith.mulf %24, %23 : vector<16x256xf32>
      %cst_16 = arith.constant 0.707106769 : f32
      %26 = vector.broadcast %cst_16 : f32 to vector<16x256xf32>
      %27 = arith.mulf %23, %26 : vector<16x256xf32>
      %28 = math.erf %27 : vector<16x256xf32>
      %cst_17 = arith.constant 1.000000e+00 : f32
      %29 = vector.broadcast %cst_17 : f32 to vector<16x256xf32>
      %30 = arith.addf %29, %28 : vector<16x256xf32>
      %31 = arith.mulf %25, %30 : vector<16x256xf32>
      %cst_18 = arith.constant dense<0.000000e+00> : vector<16xf32>
      %32 = vector.multi_reduction <add>, %31, %cst_18 [1] : vector<16x256xf32> to vector<16xf32>
      %33 = vector.shape_cast %32 : vector<16xf32> to vector<16x1xf32>
      %cst_19 = arith.constant 2.560000e+02 : f32
      %34 = vector.broadcast %cst_19 : f32 to vector<16x1xf32>
      %35 = arith.divf %33, %34 : vector<16x1xf32>
      %36 = vector.broadcast %35 : vector<16x1xf32> to vector<16x256xf32>
      %37 = arith.subf %31, %36 : vector<16x256xf32>
      %38 = arith.mulf %37, %37 : vector<16x256xf32>
      %cst_20 = arith.constant dense<0.000000e+00> : vector<16xf32>
      %39 = vector.multi_reduction <add>, %38, %cst_20 [1] : vector<16x256xf32> to vector<16xf32>
      %40 = vector.shape_cast %39 : vector<16xf32> to vector<16x1xf32>
      %cst_21 = arith.constant 2.560000e+02 : f32
      %41 = vector.broadcast %cst_21 : f32 to vector<16x1xf32>
      %42 = arith.divf %40, %41 : vector<16x1xf32>
      %cst_22 = arith.constant 9.99999974E-6 : f32
      %43 = vector.broadcast %cst_22 : f32 to vector<16x1xf32>
      %44 = arith.addf %42, %43 : vector<16x1xf32>
      %45 = math.rsqrt %44 : vector<16x1xf32>
      %46 = vector.broadcast %45 : vector<16x1xf32> to vector<16x256xf32>
      %47 = arith.mulf %37, %46 : vector<16x256xf32>
      %48 = vector.broadcast %19 : vector<1x256xf32> to vector<16x256xf32>
      %49 = arith.mulf %47, %48 : vector<16x256xf32>
      %50 = vector.broadcast %20 : vector<1x256xf32> to vector<16x256xf32>
      %51 = arith.addf %49, %50 : vector<16x256xf32>
      %c0_23 = arith.constant 0 : index
      %c0_24 = arith.constant 0 : index
      %52 = vector.load %arg6[%c0_23, %c0_24] : memref<16x256xf32, #tpu.memory_space<vmem>>, vector<16x256xf32>
      tpu.vector_store %arg6[%c0_23, %c0_24], %51 {strides = array<i32>} : memref<16x256xf32, #tpu.memory_space<vmem>>, vector<16x256xf32>,
    } else {
    }
    return
  }
  func.func @transform_0(%arg0: i32, %arg1: i32, %arg2: i32) -> (i32, i32) {
    %c0_i32 = arith.constant 0 : i32
    return %arg0, %arg2 : i32, i32
  }
  func.func @transform_1(%arg0: i32, %arg1: i32, %arg2: i32) -> (i32, i32) {
    %c0_i32 = arith.constant 0 : i32
    return %arg2, %arg1 : i32, i32
  }
  func.func @transform_2(%arg0: i32, %arg1: i32, %arg2: i32) -> (i32, i32) {
    %c0_i32 = arith.constant 0 : i32
    %c0_i32_0 = arith.constant 0 : i32
    %c0_i32_1 = arith.constant 0 : i32
    return %c0_i32, %c0_i32_0 : i32, i32
  }
  func.func @transform_3(%arg0: i32, %arg1: i32, %arg2: i32) -> (i32, i32) {
    %c0_i32 = arith.constant 0 : i32
    %c0_i32_0 = arith.constant 0 : i32
    return %arg0, %c0_i32 : i32, i32
  }
}

</mosaic_0001>

<llo_original>
// kernel: political_resonance_forward.1
$region0: #{political_resonance_forward.1}
  #allocation0 [shape = 'u32[]', space=smem, size = 0x4, offset = 0x4, fixed_abs, tag = 'smem constant byte address 0x4 - core index']
  #allocation1 [shape = 'u32[144,128]{1,0:T(1,128)}', space=vmem, size = 0x12000, scoped, tag = 'internal scratch']
  %s0 = inlined_call_operand.vmem [shape: bf16[16,256], index: 0, kind: input, shape index: {}]
  %s1 = inlined_call_operand.vmem [shape: bf16[256,256], index: 1, kind: input, shape index: {}]
  %s2 = inlined_call_operand.vmem [shape: f32[8,256], index: 2, kind: input, shape index: {}]
  %s3 = inlined_call_operand.hbm [shape: f32[16,256], index: 3, kind: output, shape index: {}]
  %s4 = sld [smem:[#allocation0]]
  $region30: #{political_resonance_forward.1} parent=0
    _
  %s6 = ssub.s32 1, %s4
  %s7 = scalar_select 0, %s6, %s4
  $region1: #{political_resonance_forward.1} parent=0
    #allocation2 [shape = 'u8[16384]{0}', space=vmem, size = 0x4000, scoped, tag = 'output window, operand 0, single buffered']
    #allocation3 [shape = 's32[1]{0}', space=sflag, size = 0x4, scoped, tag = 'scoped memory for political_resonance_forward.1']
    %8 = vsyncpa [#allocation3], 0
    // Predicated region
    $region2: #{political_resonance_forward.1} parent=1 // pred_check
      _
    $region3: #{political_resonance_forward.1} parent=1 // pred_check_branch
      %10 = sbr.rel (0) target = $region5
    $region4: #{political_resonance_forward.1} parent=1 // pred_region
      _
    $region5: #{political_resonance_forward.1} parent=1 // pred_fallthru
      _
    // Predicated region
    $region6: #{political_resonance_forward.1} parent=1 // pred_check
      _
    $region7: #{political_resonance_forward.1} parent=1 // pred_check_branch
      %12 = sbr.rel (0) target = $region9
    $region8: #{political_resonance_forward.1} parent=1 // pred_region
      _
    $region9: #{political_resonance_forward.1} parent=1 // pred_fallthru
      _
    // Predicated region
    $region10: #{political_resonance_forward.1} parent=1 // pred_check
      _
    $region11: #{political_resonance_forward.1} parent=1 // pred_check_branch
      %14 = sbr.rel (0) target = $region13
    $region12: #{political_resonance_forward.1} parent=1 // pred_region
      _
    $region13: #{political_resonance_forward.1} parent=1 // pred_fallthru
      _
    %s15 = smul.u32 0, 256
    %p16 = scmp.eq.s32.totalorder 0, 0
    // Predicated region
    $region14: #{political_resonance_forward.1} parent=1 // pred_check
      %p17 = pneg %p16
    $region15: #{political_resonance_forward.1} parent=1 // pred_check_branch
      %19 = sbr.rel (%p17) target = $region17
    $region16: #{political_resonance_forward.1} parent=1 // pred_region
      %s20 = sshra.s32 %s15, 7
      %s21 = sand.u32 %s15, 127
      %s22 = smul.addr %s20, 8
      %s23 = scalar_lea.vmem [#allocation2], %s22
      %24 = vst [vmem:[%s23] sm:$0xff] 0.0
      %25 = vst [vmem:[%s23 + $0x8] sm:$0xff] 0.0
      %26 = vst [vmem:[%s23 + $0x10] sm:$0xff] 0.0
      %27 = vst [vmem:[%s23 + $0x18] sm:$0xff] 0.0
    $region17: #{political_resonance_forward.1} parent=1 // pred_fallthru
      _
    %s28 = sshra.s32 %s15, 7
    %s29 = sand.u32 %s15, 127
    %s30 = smul.addr %s28, 8
    %s31 = scalar_lea.vmem [#allocation2], %s30
    %v32 = vld [vmem:[%s31] sm:$0xff]
    %v33 = vld [vmem:[%s31 + $0x8] sm:$0xff]
    %v34 = vld [vmem:[%s31 + $0x10] sm:$0xff]
    %v35 = vld [vmem:[%s31 + $0x18] sm:$0xff]
    %v36 = vld [vmem:[%s0] sm:$0xff]
    %v37 = vld [vmem:[%s0 + $0x8] sm:$0xff]
    %v38 = vld [vmem:[%s1] sm:$0xff]
    %v39 = vld [vmem:[%s1 + $0x8] sm:$0xff]
    %v40 = vld [vmem:[%s1 + $0x10] sm:$0xff]
    %v41 = vld [vmem:[%s1 + $0x18] sm:$0xff]
    %v42 = vld [vmem:[%s1 + $0x20] sm:$0xff]
    %v43 = vld [vmem:[%s1 + $0x28] sm:$0xff]
    %v44 = vld [vmem:[%s1 + $0x30] sm:$0xff]
    %v45 = vld [vmem:[%s1 + $0x38] sm:$0xff]
    %v46 = vld [vmem:[%s1 + $0x40] sm:$0xff]
    %v47 = vld [vmem:[%s1 + $0x48] sm:$0xff]
    %v48 = vld [vmem:[%s1 + $0x50] sm:$0xff]
    %v49 = vld [vmem:[%s1 + $0x58] sm:$0xff]
    %v50 = vld [vmem:[%s1 + $0x60] sm:$0xff]
    %v51 = vld [vmem:[%s1 + $0x68] sm:$0xff]
    %v52 = vld [vmem:[%s1 + $0x70] sm:$0xff]
    %v53 = vld [vmem:[%s1 + $0x78] sm:$0xff]
    %v54 = vld [vmem:[%s1 + $0x80] sm:$0xff]
    %v55 = vld [vmem:[%s1 + $0x88] sm:$0xff]
    %v56 = vld [vmem:[%s1 + $0x90] sm:$0xff]
    %v57 = vld [vmem:[%s1 + $0x98] sm:$0xff]
    %v58 = vld [vmem:[%s1 + $0xa0] sm:$0xff]
    %v59 = vld [vmem:[%s1 + $0xa8] sm:$0xff]
    %v60 = vld [vmem:[%s1 + $0xb0] sm:$0xff]
    %v61 = vld [vmem:[%s1 + $0xb8] sm:$0xff]
    %v62 = vld [vmem:[%s1 + $0xc0] sm:$0xff]
    %v63 = vld [vmem:[%s1 + $0xc8] sm:$0xff]
    %v64 = vld [vmem:[%s1 + $0xd0] sm:$0xff]
    %v65 = vld [vmem:[%s1 + $0xd8] sm:$0xff]
    %v66 = vld [vmem:[%s1 + $0xe0] sm:$0xff]
    %v67 = vld [vmem:[%s1 + $0xe8] sm:$0xff]
    %v68 = vld [vmem:[%s1 + $0xf0] sm:$0xff]
    %v69 = vld [vmem:[%s1 + $0xf8] sm:$0xff]
    %v72 = vunpack.c.l.b16 %v36
    %v73 = vunpack.c.h.b16 %v36
    %v74 = vunpack.c.l.b16 %v37
    %v75 = vunpack.c.h.b16 %v37
    %v76 = vpack.c.b16 %v74, %v72
    %v77 = vpack.c.b16 %v75, %v73
    %v112 = vunpack.c.l.b16 %v38
    %v113 = vunpack.c.h.b16 %v38
    %v114 = vunpack.c.l.b16 %v39
    %v115 = vunpack.c.h.b16 %v39
    %v116 = vunpack.c.l.b16 %v40
    %v117 = vunpack.c.h.b16 %v40
    %v118 = vunpack.c.l.b16 %v41
    %v119 = vunpack.c.h.b16 %v41
    %v120 = vunpack.c.l.b16 %v42
    %v121 = vunpack.c.h.b16 %v42
    %v122 = vunpack.c.l.b16 %v43
    %v123 = vunpack.c.h.b16 %v43
    %v124 = vunpack.c.l.b16 %v44
    %v125 = vunpack.c.h.b16 %v44
    %v126 = vunpack.c.l.b16 %v45
    %v127 = vunpack.c.h.b16 %v45
    %v128 = vunpack.c.l.b16 %v46
    %v129 = vunpack.c.h.b16 %v46
    %v130 = vunpack.c.l.b16 %v47
    %v131 = vunpack.c.h.b16 %v47
    %v132 = vunpack.c.l.b16 %v48
    %v133 = vunpack.c.h.b16 %v48
    %v134 = vunpack.c.l.b16 %v49
    %v135 = vunpack.c.h.b16 %v49
    %v136 = vunpack.c.l.b16 %v50
    %v137 = vunpack.c.h.b16 %v50
    %v138 = vunpack.c.l.b16 %v51
    %v139 = vunpack.c.h.b16 %v51
    %v140 = vunpack.c.l.b16 %v52
    %v141 = vunpack.c.h.b16 %v52
    %v142 = vunpack.c.l.b16 %v53
    %v143 = vunpack.c.h.b16 %v53
    %v144 = vunpack.c.l.b16 %v54
    %v145 = vunpack.c.h.b16 %v54
    %v146 = vunpack.c.l.b16 %v55
    %v147 = vunpack.c.h.b16 %v55
    %v148 = vunpack.c.l.b16 %v56
    %v149 = vunpack.c.h.b16 %v56
    %v150 = vunpack.c.l.b16 %v57
    %v151 = vunpack.c.h.b16 %v57
    %v152 = vunpack.c.l.b16 %v58
    %v153 = vunpack.c.h.b16 %v58
    %v154 = vunpack.c.l.b16 %v59
    %v155 = vunpack.c.h.b16 %v59
    %v156 = vunpack.c.l.b16 %v60
    %v157 = vunpack.c.h.b16 %v60
    %v158 = vunpack.c.l.b16 %v61
    %v159 = vunpack.c.h.b16 %v61
    %v160 = vunpack.c.l.b16 %v62
    %v161 = vunpack.c.h.b16 %v62
    %v162 = vunpack.c.l.b16 %v63
    %v163 = vunpack.c.h.b16 %v63
    %v164 = vunpack.c.l.b16 %v64
    %v165 = vunpack.c.h.b16 %v64
    %v166 = vunpack.c.l.b16 %v65
    %v167 = vunpack.c.h.b16 %v65
    %v168 = vunpack.c.l.b16 %v66
    %v169 = vunpack.c.h.b16 %v66
    %v170 = vunpack.c.l.b16 %v67
    %v171 = vunpack.c.h.b16 %v67
    %v172 = vunpack.c.l.b16 %v68
    %v173 = vunpack.c.h.b16 %v68
    %v174 = vunpack.c.l.b16 %v69
    %v175 = vunpack.c.h.b16 %v69
    %v176 = vpack.c.b16 %v114, %v112
    %v177 = vpack.c.b16 %v115, %v113
    %v178 = vpack.c.b16 %v118, %v116
    %v179 = vpack.c.b16 %v119, %v117
    %v180 = vpack.c.b16 %v122, %v120
    %v181 = vpack.c.b16 %v123, %v121
    %v182 = vpack.c.b16 %v126, %v124
    %v183 = vpack.c.b16 %v127, %v125
    %v184 = vpack.c.b16 %v130, %v128
    %v185 = vpack.c.b16 %v131, %v129
    %v186 = vpack.c.b16 %v134, %v132
    %v187 = vpack.c.b16 %v135, %v133
    %v188 = vpack.c.b16 %v138, %v136
    %v189 = vpack.c.b16 %v139, %v137
    %v190 = vpack.c.b16 %v142, %v140
    %v191 = vpack.c.b16 %v143, %v141
    %v192 = vpack.c.b16 %v146, %v144
    %v193 = vpack.c.b16 %v147, %v145
    %v194 = vpack.c.b16 %v150, %v148
    %v195 = vpack.c.b16 %v151, %v149
    %v196 = vpack.c.b16 %v154, %v152
    %v197 = vpack.c.b16 %v155, %v153
    %v198 = vpack.c.b16 %v158, %v156
    %v199 = vpack.c.b16 %v159, %v157
    %v200 = vpack.c.b16 %v162, %v160
    %v201 = vpack.c.b16 %v163, %v161
    %v202 = vpack.c.b16 %v166, %v164
    %v203 = vpack.c.b16 %v167, %v165
    %v204 = vpack.c.b16 %v170, %v168
    %v205 = vpack.c.b16 %v171, %v169
    %v206 = vpack.c.b16 %v174, %v172
    %v207 = vpack.c.b16 %v175, %v173
    %240 = vmatprep.subr.bf16.mxu0 %v177
    %241 = vmatpush1.bf16.msra.mxu0 %v176
    %242 = vmatprep.subr.bf16.mxu0 %v179
    %243 = vmatpush1.bf16.msra.mxu0 %v178
    %244 = vmatprep.subr.bf16.mxu0 %v181
    %245 = vmatpush1.bf16.msra.mxu0 %v180
    %246 = vmatprep.subr.bf16.mxu0 %v183
    %247 = vmatpush1.bf16.msra.mxu0 %v182
    %248 = vmatprep.subr.bf16.mxu0 %v185
    %249 = vmatpush1.bf16.msra.mxu0 %v184
    %250 = vmatprep.subr.bf16.mxu0 %v187
    %251 = vmatpush1.bf16.msra.mxu0 %v186
    %252 = vmatprep.subr.bf16.mxu0 %v189
    %253 = vmatpush1.bf16.msra.mxu0 %v188
    %254 = vmatprep.subr.bf16.mxu0 %v191
    %255 = vmatpush1.bf16.msra.mxu0 %v190
    %256 = vmatprep.subr.bf16.mxu0 %v193
    %257 = vmatpush1.bf16.msra.mxu0 %v192
    %258 = vmatprep.subr.bf16.mxu0 %v195
    %259 = vmatpush1.bf16.msra.mxu0 %v194
    %260 = vmatprep.subr.bf16.mxu0 %v197
    %261 = vmatpush1.bf16.msra.mxu0 %v196
    %262 = vmatprep.subr.bf16.mxu0 %v199
    %263 = vmatpush1.bf16.msra.mxu0 %v198
    %264 = vmatprep.subr.bf16.mxu0 %v201
    %265 = vmatpush1.bf16.msra.mxu0 %v200
    %266 = vmatprep.subr.bf16.mxu0 %v203
    %267 = vmatpush1.bf16.msra.mxu0 %v202
    %268 = vmatprep.subr.bf16.mxu0 %v205
    %269 = vmatpush1.bf16.msra.mxu0 %v204
    %270 = vmatprep.subr.bf16.mxu0 %v207
    %271 = vmatpush1.bf16.msra.mxu0 %v206
    %272 = vmatprep.mubr.bf16.mxu0 %v77
    %273 = vmatmul.mubr.bf16.gmra.mrb[0].mxu0 %v76
    %v274 = vpop.f32.mrb[0].mxu0
    %v275 = vadd.f32 0.0, %v274
    %v276 = vpop.f32.mrb[0].mxu0
    %v277 = vadd.f32 0.0, %v276
    %v278 = vpop.f32.mrb[0].mxu0
    %v279 = vadd.f32 0.0, %v278
    %v280 = vpop.f32.mrb[0].mxu0
    %v281 = vadd.f32 0.0, %v280
    %282 = vdwg.mxu0
    %v283 = vadd.f32 %v32, %v275
    %v284 = vadd.f32 %v33, %v277
    %v285 = vadd.f32 %v34, %v279
    %v286 = vadd.f32 %v35, %v281
    %287 = vst [vmem:[%s31] sm:$0xff] %v283
    %288 = vst [vmem:[%s31 + $0x8] sm:$0xff] %v284
    %289 = vst [vmem:[%s31 + $0x10] sm:$0xff] %v285
    %290 = vst [vmem:[%s31 + $0x18] sm:$0xff] %v286
    %p291 = scmp.eq.s32.totalorder 0, 0
    %p292 = pnand %p291, %p16
    %p293 = pneg %p292
    // Predicated region
    $region18: #{political_resonance_forward.1} parent=1 // pred_check
      _
    $region19: #{political_resonance_forward.1} parent=1 // pred_check_branch
      %295 = sbr.rel (%p292) target = $region21
    $region20: #{political_resonance_forward.1} parent=1 // pred_region
      %v296 = vld [vmem:[%s2] ss:$8 sm:$0x3]
      %s297 = scalar_lea.vmem %s2, 1
      %v298 = vld [vmem:[%s297] ss:$8 sm:$0x3]
      %s299 = scalar_lea.vmem %s2, 2
      %v300 = vld [vmem:[%s299] ss:$8 sm:$0x3]
      %v301 = vld [vmem:[#allocation2] sm:$0xff]
      %v302 = vld [vmem:[#allocation2 + $0x8] sm:$0xff]
      %v303 = vld [vmem:[#allocation2 + $0x10] sm:$0xff]
      %v304 = vld [vmem:[#allocation2 + $0x18] sm:$0xff]
      %v306 = vlaneseq
      %v307 = vshrl.u32 %v306, 7
      %v308 = vsub.s32 0, %v307
      %v309 = vrot.slane %v296, %v308
      %v310 = vlaneseq
      %v311 = vshrl.u32 %v310, 7
      %v312 = vsub.s32 1, %v311
      %v313 = vrot.slane %v296, %v312
      %v316 = vadd.f32 %v301, %v309
      %v317 = vadd.f32 %v302, %v313
      %v318 = vadd.f32 %v303, %v309
      %v319 = vadd.f32 %v304, %v313
      %v320 = vmul.f32 %v316, 0.5
      %v321 = vmul.f32 %v317, 0.5
      %v322 = vmul.f32 %v318, 0.5
      %v323 = vmul.f32 %v319, 0.5
      %v324 = vmul.f32 %v316, 0.70710677
      %v325 = vmul.f32 %v317, 0.70710677
      %v326 = vmul.f32 %v318, 0.70710677
      %v327 = vmul.f32 %v319, 0.70710677
      %v328 = verf.f32.pop %v324
      %v329 = verf.f32.pop %v325
      %v330 = verf.f32.pop %v326
      %v331 = verf.f32.pop %v327
      %v332 = vadd.f32 %v328, 1.0
      %v333 = vadd.f32 %v329, 1.0
      %v334 = vadd.f32 %v330, 1.0
      %v335 = vadd.f32 %v331, 1.0
      %v336 = vmul.f32 %v320, %v332
      %v337 = vmul.f32 %v321, %v333
      %v338 = vmul.f32 %v322, %v334
      %v339 = vmul.f32 %v323, %v335
      %v340 = vadd.f32 %v336, %v337
      %341 = vadd.xlane.f32.xlu0 %v340
      %v342 = vpop.xlane.xlu0 %341
      %v343 = vadd.f32 %v338, %v339
      %344 = vadd.xlane.f32.xlu0 %v343
      %v345 = vpop.xlane.xlu0 %344
      %v346 = vrcp.pop 256.0
      %v347 = vmul.f32 %v342, %v346
      %v348 = vmul.f32 %v345, %v346
      %v349 = vsub.f32 %v336, %v347
      %v350 = vsub.f32 %v337, %v347
      %v351 = vsub.f32 %v338, %v348
      %v352 = vsub.f32 %v339, %v348
      %v353 = vmul.f32 %v349, %v349
      %v354 = vmul.f32 %v350, %v350
      %v355 = vmul.f32 %v351, %v351
      %v356 = vmul.f32 %v352, %v352
      %v357 = vadd.f32 %v353, %v354
      %358 = vadd.xlane.f32.xlu0 %v357
      %v359 = vpop.xlane.xlu0 %358
      %v360 = vadd.f32 %v355, %v356
      %361 = vadd.xlane.f32.xlu0 %v360
      %v362 = vpop.xlane.xlu0 %361
      %v363 = vmul.f32 %v359, %v346
      %v364 = vmul.f32 %v362, %v346
      %v365 = vadd.f32 %v363, 1e-05
      %v366 = vadd.f32 %v364, 1e-05
      %v367 = vrsqrt.pop %v365
      %v368 = vrsqrt.pop %v366
      %v369 = vmul.f32 %v349, %v367
      %v370 = vmul.f32 %v350, %v367
      %v371 = vmul.f32 %v351, %v368
      %v372 = vmul.f32 %v352, %v368
      %v374 = vlaneseq
      %v375 = vshrl.u32 %v374, 7
      %v376 = vsub.s32 0, %v375
      %v377 = vrot.slane %v298, %v376
      %v378 = vlaneseq
      %v379 = vshrl.u32 %v378, 7
      %v380 = vsub.s32 1, %v379
      %v381 = vrot.slane %v298, %v380
      %v384 = vmul.f32 %v369, %v377
      %v385 = vmul.f32 %v370, %v381
      %v386 = vmul.f32 %v371, %v377
      %v387 = vmul.f32 %v372, %v381
      %v389 = vlaneseq
      %v390 = vshrl.u32 %v389, 7
      %v391 = vsub.s32 0, %v390
      %v392 = vrot.slane %v300, %v391
      %v393 = vlaneseq
      %v394 = vshrl.u32 %v393, 7
      %v395 = vsub.s32 1, %v394
      %v396 = vrot.slane %v300, %v395
      %v399 = vadd.f32 %v384, %v392
      %v400 = vadd.f32 %v385, %v396
      %v401 = vadd.f32 %v386, %v392
      %v402 = vadd.f32 %v387, %v396
      %403 = vst [vmem:[#allocation2] sm:$0xff] %v399
      %404 = vst [vmem:[#allocation2 + $0x8] sm:$0xff] %v400
      %405 = vst [vmem:[#allocation2 + $0x10] sm:$0xff] %v401
      %406 = vst [vmem:[#allocation2 + $0x18] sm:$0xff] %v402
    $region21: #{political_resonance_forward.1} parent=1 // pred_fallthru
      _
    // Predicated region
    $region22: #{political_resonance_forward.1} parent=1 // pred_check
      _
    $region23: #{political_resonance_forward.1} parent=1 // pred_check_branch
      %408 = sbr.rel (0) target = $region25
    $region24: #{political_resonance_forward.1} parent=1 // pred_region
      %s410 = ssub.s32 512, 512
      %411 = vsyncadd [#allocation3], %s410
      %s412 = sshll.u32 [#allocation2], 4
      %s413 = int_to_ptr.vmem [resolvable:$true] %s412
      %418 = dma.vmem_to_hbm [thread:$0]  %s413, 512, %s3, [#allocation3], 256, 256, 16
    $region25: #{political_resonance_forward.1} parent=1 // pred_fallthru
      _
    // Predicated region
    $region26: #{political_resonance_forward.1} parent=1 // pred_check
      _
    $region27: #{political_resonance_forward.1} parent=1 // pred_check_branch
      %420 = sbr.rel (0) target = $region29
    $region28: #{political_resonance_forward.1} parent=1 // pred_region
      %421 = dma.done [#allocation3], 512
    $region29: #{political_resonance_forward.1} parent=1 // pred_fallthru
      _
    %422 = vsyncpa [#allocation3], 1

</llo_original>
